<compile_context>
chip_gen: v7x
topology: tpu7x:2x2x1
jax: 0.10.0
libtpu: 0.0.40
codegen_flags: <defaults>
</compile_context>

<pallas_src>
import functools

import jax
import jax.numpy as jnp
from jax import lax
from jax.experimental import pallas as pl
from jax.experimental.pallas import tpu as pltpu

_SMOOTH = 1e-5


def _dice_partial_kernel(n_classes, tile_m, valid_rows_last, ragged, apply_softmax,
                         score_ref, tgt_ref, out_ref):
    """Per-(batch, pixel-tile) partial sums.

    score_ref: (C, TILE_M, 128) native dtype (f32 or bf16)
    tgt_ref:   (1, TILE_M, 128) int8  (-1 on padded lanes)
    out_ref:   (2, C, 128) f32 -- plane 0: sum(score*onehot), plane 1: sum(score^2)
    """

    def compute(valid):
        x = score_ref[...].astype(jnp.float32)               # cast on load, f32 math
        if apply_softmax:
            m = jnp.max(x, axis=0, keepdims=True)             # per-pixel max over classes
            e = jnp.exp(x - m)                                # EUP
            inv = pl.reciprocal(jnp.sum(e, axis=0, keepdims=True), approx=False)
            x = e * inv                                       # 1 recip + C muls per pixel
        tgt = tgt_ref[...].astype(jnp.int32)                  # (1, TILE_M, 128)
        cls = lax.broadcasted_iota(jnp.int32, (n_classes, 1, 128), 0)
        hot = tgt == cls                                      # (C, TILE_M, 128) one-hot mask
        if valid is not None:                                 # ragged last tile only
            hot = jnp.logical_and(hot, valid)
            x = jnp.where(valid, x, 0.0)
        # Lane-dense per-class partials (reduce only the sublane/tile axis).
        out_ref[0] = jnp.sum(jnp.where(hot, x, 0.0), axis=1)  # sum(score * target)
        out_ref[1] = jnp.sum(x * x, axis=1)                   # sum(score^2)

    if not ragged:
        compute(None)                                         # fast path: no mask anywhere
    else:
        last = pl.num_programs(1) - 1

        @pl.when(pl.program_id(1) < last)
        def _():
            compute(None)

        @pl.when(pl.program_id(1) == last)
        def _():
            # Only the ragged last tile pays for the OOB row mask (block rows past
            # m_rows hold unspecified VMEM that could alias valid class ids).
            row = lax.broadcasted_iota(jnp.int32, (1, tile_m, 128), 1)
            compute(row < valid_rows_last)


def dice_loss(inputs, target, n_classes, weight=None, softmax=False, tile_m=None):
    """DiceLossed.forward. inputs: (B, C, H, W) float (f32/bf16), target: (B, H, W) int."""
    B, C, H, W = inputs.shape
    assert C == n_classes, "predict & target shape do not match"
    n_pix = H * W
    m_rows = pl.cdiv(n_pix, 128)
    pad = m_rows * 128 - n_pix

    score = inputs.reshape(B, C, n_pix)                      # free reshape of contiguous NCHW
    tgt = target.reshape(B, 1, n_pix).astype(jnp.int8)       # 1 B/pixel target stream
    if pad:
        # TODO(synk): when H*W % 128 != 0 this still materialises one padded copy of the
        # activation tensor; a manual-DMA tail path could avoid it but isn't worth the
        # complexity here.  Padded lanes: score=0 / target=-1, corrected in the epilogue.
        score = jnp.pad(score, ((0, 0), (0, 0), (0, pad)))
        tgt = jnp.pad(tgt, ((0, 0), (0, 0), (0, pad)), constant_values=-1)
    score = score.reshape(B, C, m_rows, 128)
    tgt = tgt.reshape(B, 1, m_rows, 128)

    # --- tile the pixel-row axis ------------------------------------------------------
    # ~3 MiB per double-buffered score block; tile_m is a multiple of 32 (int8/bf16
    # sublane packing) and preferably an exact divisor of m_rows (no ragged tile);
    # keep >= ~4 grid steps so both v7x TensorCores get work.
    itemsize = jnp.dtype(score.dtype).itemsize
    bytes_per_row = (C * itemsize + 1) * 128
    if tile_m is None:
        budget = max(32, (3 * 1024 * 1024) // bytes_per_row)
        want_tiles = -(-4 // max(B, 1))                      # ceil(4 / B)
        budget = min(budget, max(32, -(-m_rows // want_tiles)))
        tile_m = budget
    tile_m = int(tile_m)
    if tile_m >= m_rows:
        tile_m = m_rows                                      # single tile: block == full dim
    else:
        tile_m = max(32, (tile_m // 32) * 32)
        if tile_m >= m_rows:
            tile_m = m_rows
        else:
            for cand in range(tile_m, 31, -32):              # prefer an exact divisor
                if m_rows % cand == 0:
                    tile_m = cand
                    break
    num_tiles = pl.cdiv(m_rows, tile_m)
    ragged = (m_rows % tile_m) != 0
    valid_rows_last = m_rows - (num_tiles - 1) * tile_m

    kernel = functools.partial(_dice_partial_kernel, n_classes, tile_m,
                               valid_rows_last, bool(ragged), bool(softmax))

    packed = pl.pallas_call(
        kernel,
        out_shape=jax.ShapeDtypeStruct((B, num_tiles, 2, C, 128), jnp.float32),
        grid_spec=pltpu.PrefetchScalarGridSpec(
            num_scalar_prefetch=0,
            grid=(B, num_tiles),
            in_specs=[
                pl.BlockSpec((None, C, tile_m, 128), lambda b, t: (b, 0, t, 0)),
                pl.BlockSpec((None, 1, tile_m, 128), lambda b, t: (b, 0, t, 0)),
            ],
            out_specs=pl.BlockSpec((None, None, 2, C, 128),
                                   lambda b, t: (b, t, 0, 0, 0)),
        ),
        compiler_params=pltpu.CompilerParams(
            dimension_semantics=("parallel", "parallel")),    # no carried state
    )(score, tgt)

    # --- tiny epilogue ------------------------------------------------------------------
    sums = jnp.sum(packed, axis=(0, 1, 4))                   # (2, C)
    intersect = sums[0]
    z_sum = sums[1]
    if softmax and pad:
        # Padded lanes (score 0 -> softmax 1/C) contribute exactly B*pad/C^2 per class
        # to sum(score^2); remove it here instead of masking every pixel in-kernel.
        z_sum = z_sum - (B * pad) * (1.0 / n_classes) ** 2
    # Per-class pixel counts (y_sum == sum(target^2) == sum(target)) from the tiny
    # int8 target stream; padded lanes are -1 and never match a class.
    cls = jnp.arange(n_classes, dtype=jnp.int32)
    y_sum = jnp.sum((tgt.astype(jnp.int32)[..., None] == cls).astype(jnp.float32),
                    axis=(0, 1, 2, 3))

    if weight is None:
        weight = [1.0] * n_classes
    w = jnp.asarray(weight, jnp.float32)
    dice = 1.0 - (2.0 * intersect + _SMOOTH) / (z_sum + y_sum + _SMOOTH)
    return jnp.sum(dice * w) / n_classes


def _ref_dice_loss(inputs, target, n_classes, weight=None, softmax=False):
    """Pure-JAX reference mirroring the PyTorch DiceLossed module."""
    inputs = inputs.astype(jnp.float32)
    if softmax:
        inputs = jax.nn.softmax(inputs, axis=1)
    one_hot = (target[:, None, :, :]
               == jnp.arange(n_classes)[None, :, None, None]).astype(jnp.float32)
    if weight is None:
        weight = [1.0] * n_classes
    smooth = 1e-5
    loss = 0.0
    for i in range(n_classes):
        s = inputs[:, i]
        t = one_hot[:, i]
        inter = jnp.sum(s * t)
        y = jnp.sum(t * t)
        z = jnp.sum(s * s)
        d = 1.0 - (2.0 * inter + smooth) / (z + y + smooth)
        loss = loss + d * weight[i]
    return loss / n_classes


if __name__ == "__main__":
    n_classes = 9                                # matches SegmentationModel / DiceLossed(9)
    B, H, W = 2, 16, 16

    key = jax.random.PRNGKey(0)
    k1, k2, k3 = jax.random.split(key, 3)
    logits = jax.random.normal(k1, (B, n_classes, H, W), dtype=jnp.float32)
    target = jax.random.randint(k2, (B, H, W), 0, n_classes, dtype=jnp.int32)

    # 1) f32 path, H*W % 128 == 0 — pure fast path, no masks, no corrections.
    out = dice_loss(logits, target, n_classes, softmax=True)
    out = jax.block_until_ready(out)
    ref = _ref_dice_loss(logits, target, n_classes, softmax=True)
    assert jnp.allclose(out, ref, atol=1e-5, rtol=1e-5), (out, ref)

    # 2) bf16-fed path + non-multiple-of-128 spatial size (epilogue z correction) + weights.
    H2, W2 = 2, 12
    logits2 = jax.random.normal(k3, (B, n_classes, H2, W2), dtype=jnp.float32)
    target2 = jax.random.randint(k2, (B, H2, W2), 0, n_classes, dtype=jnp.int32)
    wts = [0.5 + 0.1 * i for i in range(n_classes)]
    out2 = dice_loss(logits2.astype(jnp.bfloat16), target2, n_classes,
                     weight=wts, softmax=True)
    out2 = jax.block_until_ready(out2)
    ref2 = _ref_dice_loss(logits2.astype(jnp.bfloat16).astype(jnp.float32), target2,
                          n_classes, weight=wts, softmax=True)
    assert jnp.allclose(out2, ref2, atol=1e-5, rtol=1e-5), (out2, ref2)

    # 3) larger odd spatial size exercising the ragged-last-tile (pl.when-masked) path.
    H3, W3 = 72, 72                              # m_rows = 41 -> tile_m = 32, ragged tail
    logits3 = jax.random.normal(k1, (B, n_classes, H3, W3), dtype=jnp.float32)
    target3 = jax.random.randint(k3, (B, H3, W3), 0, n_classes, dtype=jnp.int32)
    out3 = dice_loss(logits3, target3, n_classes, softmax=True)
    out3 = jax.block_until_ready(out3)
    ref3 = _ref_dice_loss(logits3, target3, n_classes, softmax=True)
    assert jnp.allclose(out3, ref3, atol=1e-5, rtol=1e-5), (out3, ref3)

    print("KERNEL_OK")
</pallas_src>

<mosaic_0001>
module attributes {stable_mosaic.version = 11 : i64} {
  func.func @_dice_partial_kernel(%arg0: i32, %arg1: i32, %arg2: memref<1x9x2x128xf32, #tpu.memory_space<vmem>>, %arg3: memref<1x1x2x128xi8, #tpu.memory_space<vmem>>, %arg4: memref<1x1x2x9x128xf32, #tpu.memory_space<vmem>>) attributes {dimension_semantics = [#tpu.dimension_semantics<parallel>, #tpu.dimension_semantics<parallel>], iteration_bounds = array<i64: 2, 1>, scalar_prefetch = 0 : i64, scratch_operands = 0 : i64, tpu.core_type = #tpu.core_type<tc>, window_params = [{transform_indices = @transform_0, window_bounds = array<i64: 1, 9, 2, 128>}, {transform_indices = @transform_1, window_bounds = array<i64: 1, 1, 2, 128>}, {transform_indices = @transform_2, window_bounds = array<i64: 1, 1, 2, 9, 128>}]} {
    %c0 = arith.constant 0 : index
    %c0_0 = arith.constant 0 : index
    %c0_1 = arith.constant 0 : index
    %c0_2 = arith.constant 0 : index
    %0 = vector.load %arg2[%c0, %c0_0, %c0_1, %c0_2] : memref<1x9x2x128xf32, #tpu.memory_space<vmem>>, vector<1x9x2x128xf32>
    %1 = vector.shape_cast %0 : vector<1x9x2x128xf32> to vector<9x2x128xf32>
    %cst = arith.constant dense<0xFF800000> : vector<2x128xf32>
    %2 = vector.multi_reduction <maximumf>, %1, %cst [0] : vector<9x2x128xf32> to vector<2x128xf32>
    %3 = vector.shape_cast %2 : vector<2x128xf32> to vector<1x2x128xf32>
    %4 = vector.broadcast %3 : vector<1x2x128xf32> to vector<9x2x128xf32>
    %5 = arith.subf %1, %4 : vector<9x2x128xf32>
    %6 = math.exp %5 : vector<9x2x128xf32>
    %cst_3 = arith.constant dense<0.000000e+00> : vector<2x128xf32>
    %7 = vector.multi_reduction <add>, %6, %cst_3 [0] : vector<9x2x128xf32> to vector<2x128xf32>
    %8 = vector.shape_cast %7 : vector<2x128xf32> to vector<1x2x128xf32>
    %9 = tpu.reciprocal %8 : vector<1x2x128xf32> -> vector<1x2x128xf32>
    %10 = vector.broadcast %9 : vector<1x2x128xf32> to vector<9x2x128xf32>
    %11 = arith.mulf %6, %10 : vector<9x2x128xf32>
    %c0_4 = arith.constant 0 : index
    %c0_5 = arith.constant 0 : index
    %c0_6 = arith.constant 0 : index
    %c0_7 = arith.constant 0 : index
    %12 = vector.load %arg3[%c0_4, %c0_5, %c0_6, %c0_7] : memref<1x1x2x128xi8, #tpu.memory_space<vmem>>, vector<1x1x2x128xi8>
    %13 = vector.shape_cast %12 : vector<1x1x2x128xi8> to vector<1x2x128xi8>
    %14 = arith.extsi %13 : vector<1x2x128xi8> to vector<1x2x128xi32>
    %15 = tpu.iota {dimensions = array<i32: 0>} : vector<9x1x128xi32>
    %16 = vector.broadcast %14 : vector<1x2x128xi32> to vector<9x2x128xi32>
    %17 = vector.broadcast %15 : vector<9x1x128xi32> to vector<9x2x128xi32>
    %18 = arith.cmpi eq, %16, %17 : vector<9x2x128xi32>
    %cst_8 = arith.constant 0.000000e+00 : f32
    %19 = vector.broadcast %cst_8 : f32 to vector<9x2x128xf32>
    %20 = arith.select %18, %11, %19 : vector<9x2x128xi1>, vector<9x2x128xf32>
    %cst_9 = arith.constant dense<0.000000e+00> : vector<9x128xf32>
    %21 = vector.multi_reduction <add>, %20, %cst_9 [1] : vector<9x2x128xf32> to vector<9x128xf32>
    %c0_10 = arith.constant 0 : index
    %c0_11 = arith.constant 0 : index
    %c0_12 = arith.constant 0 : index
    %c0_13 = arith.constant 0 : index
    %c0_14 = arith.constant 0 : index
    %22 = vector.load %arg4[%c0_10, %c0_11, %c0_12, %c0_13, %c0_14] : memref<1x1x2x9x128xf32, #tpu.memory_space<vmem>>, vector<1x1x1x9x128xf32>
    %23 = vector.shape_cast %22 : vector<1x1x1x9x128xf32> to vector<9x128xf32>
    %24 = vector.shape_cast %21 : vector<9x128xf32> to vector<1x1x1x9x128xf32>
    tpu.vector_store %arg4[%c0_10, %c0_11, %c0_12, %c0_13, %c0_14], %24 {strides = array<i32>} : memref<1x1x2x9x128xf32, #tpu.memory_space<vmem>>, vector<1x1x1x9x128xf32>,
    %25 = arith.mulf %11, %11 : vector<9x2x128xf32>
    %cst_15 = arith.constant dense<0.000000e+00> : vector<9x128xf32>
    %26 = vector.multi_reduction <add>, %25, %cst_15 [1] : vector<9x2x128xf32> to vector<9x128xf32>
    %c0_16 = arith.constant 0 : index
    %c0_17 = arith.constant 0 : index
    %c1 = arith.constant 1 : index
    %c0_18 = arith.constant 0 : index
    %c0_19 = arith.constant 0 : index
    %27 = vector.load %arg4[%c0_16, %c0_17, %c1, %c0_18, %c0_19] : memref<1x1x2x9x128xf32, #tpu.memory_space<vmem>>, vector<1x1x1x9x128xf32>
    %28 = vector.shape_cast %27 : vector<1x1x1x9x128xf32> to vector<9x128xf32>
    %29 = vector.shape_cast %26 : vector<9x128xf32> to vector<1x1x1x9x128xf32>
    tpu.vector_store %arg4[%c0_16, %c0_17, %c1, %c0_18, %c0_19], %29 {strides = array<i32>} : memref<1x1x2x9x128xf32, #tpu.memory_space<vmem>>, vector<1x1x1x9x128xf32>,
    return
  }
  func.func @transform_0(%arg0: i32, %arg1: i32) -> (i32, i32, i32, i32) {
    %c0_i32 = arith.constant 0 : i32
    %c0_i32_0 = arith.constant 0 : i32
    %c0_i32_1 = arith.constant 0 : i32
    return %arg0, %c0_i32, %arg1, %c0_i32_0 : i32, i32, i32, i32
  }
  func.func @transform_1(%arg0: i32, %arg1: i32) -> (i32, i32, i32, i32) {
    %c0_i32 = arith.constant 0 : i32
    %c0_i32_0 = arith.constant 0 : i32
    %c0_i32_1 = arith.constant 0 : i32
    return %arg0, %c0_i32, %arg1, %c0_i32_0 : i32, i32, i32, i32
  }
  func.func @transform_2(%arg0: i32, %arg1: i32) -> (i32, i32, i32, i32, i32) {
    %c0_i32 = arith.constant 0 : i32
    %c0_i32_0 = arith.constant 0 : i32
    %c0_i32_1 = arith.constant 0 : i32
    %c0_i32_2 = arith.constant 0 : i32
    return %arg0, %arg1, %c0_i32, %c0_i32_0, %c0_i32_1 : i32, i32, i32, i32, i32
  }
}

</mosaic_0001>

<llo_original>
// kernel: tpu_custom_call.1
$region0: #{tpu_custom_call.1}
  #allocation0 [shape = 'u32[]', space=smem, size = 0x4, offset = 0x4, fixed_abs, tag = 'smem constant byte address 0x4 - core index']
  #allocation1 [shape = 'u32[144,128]{1,0:T(1,128)}', space=vmem, size = 0x12000, scoped, tag = 'internal scratch']
  %s0 = inlined_call_operand.hbm [shape: f32[2,9,2,128], index: 0, kind: input, shape index: {}]
  %s1 = inlined_call_operand.vmem [shape: s8[2,1,2,128], index: 1, kind: input, shape index: {}]
  %s2 = inlined_call_operand.vmem [shape: f32[2,1,2,9,128], index: 2, kind: output, shape index: {}]
  %s3 = sld [smem:[#allocation0]]
  $region45: #{tpu_custom_call.1} parent=0
    _
  %s5 = ssub.s32 1, %s3
  %s6 = scalar_select 0, %s5, %s3
  $region1: #{tpu_custom_call.1} parent=0
    #allocation2 [shape = 'u8[18432]{0}', space=vmem, size = 0x4800, scoped, tag = 'input window, operand 0']
    #allocation3 [shape = 's32[2]{0}', space=sflag, size = 0x8, scoped, tag = 'scoped memory for tpu_custom_call.1']
    %7 = vsyncpa [#allocation3], 0
    %s8 = scalar_lea.sflag [#allocation3], 1
    %9 = vsyncpa %s8, 0
    loop: start=0, step=1, limit=4
    $region2: #{tpu_custom_call.1} parent=1 // loop_pre_header
      _
    $region3: #{tpu_custom_call.1} parent=1 // loop_header
      %s11 = sphi 0, %s15
      %p12 = scmp.ge.s32.totalorder %s11, 4
      %s18 = sphi 0, %s30
      %s19 = sphi 0, %s26
      %s20 = sphi 0, %s18
      %s21 = sphi 0, %s19
      %s22 = sphi 0, %s20
      %s23 = sphi 0, %s21
      %s35 = sphi 0, %s37
      %s38 = sphi 0, %s35
      %s39 = sphi 0, %s38
      %s55 = sphi 0, %s39
      %s63 = sphi 0, %s65
      %s66 = sphi 0, %s63
      %s67 = sphi 0, %s66
      %s83 = sphi 0, %s67
      %s91 = sphi 0, %s93
      %s94 = sphi 0, %s91
      %s95 = sphi 0, %s94
      %s111 = sphi 0, %s95
    $region4: #{tpu_custom_call.1} parent=1 // loop_header_branch
      %14 = sbr.rel (%p12) target = $region8
    $region5: #{tpu_custom_call.1} parent=1 // loop_body
      %s16 = ssub.s32 %s11, 1
      %s17 = ssub.s32 %s11, 2
      %s24 = sadd.s32 1, %s19
      %p25 = scmp.ge.s32.totalorder %s24, 1
      %s26 = scalar_select %p25, 0, %s24
      %s27 = sadd.s32 1, %s18
      %s28 = scalar_select %p25, %s27, %s18
      %p29 = scmp.ge.s32.totalorder %s28, 2
      %s30 = scalar_select %p29, 0, %s28
      %s31 = ssub.s32 %s18, %s30
      %s32 = ssub.s32 %s19, %s26
      %s33 = sor.u32 %s31, %s32
      %p34 = scmp.eq.s32.totalorder %s33, 0
      %s36 = sadd.s32 %s35, 1
      %s37 = scalar_select %p34, %s35, %s36
      %p40 = pneg %p34
      %p41 = scmp.eq.s32.totalorder %s11, 1
      %p42 = por %p40, %p41
      %p43 = scmp.ne.s32.totalorder %s35, %s38
      %p44 = scmp.eq.s32.totalorder %s11, 0
      %p45 = por %p43, %p44
      %p46 = scmp.ne.s32.totalorder %s35, %s38
      %p47 = scmp.eq.s32.totalorder %s16, 1
      %p48 = por %p46, %p47
      %p49 = scmp.ne.s32.totalorder %s38, %s39
      %p50 = scmp.eq.s32.totalorder %s16, 0
      %p51 = por %p49, %p50
      %p52 = scmp.ne.s32.totalorder %s38, %s39
      %p53 = scmp.eq.s32.totalorder %s17, 1
      %p54 = por %p52, %p53
      %p56 = scmp.ne.s32.totalorder %s39, %s55
      %p57 = scmp.eq.s32.totalorder %s17, 0
      %p58 = por %p56, %p57
      %s59 = ssub.s32 %s18, %s30
      %s60 = ssub.s32 %s19, %s26
      %s61 = sor.u32 %s59, %s60
      %p62 = scmp.eq.s32.totalorder %s61, 0
      %s64 = sadd.s32 %s63, 1
      %s65 = scalar_select %p62, %s63, %s64
      %p68 = pneg %p62
      %p69 = scmp.eq.s32.totalorder %s11, 1
      %p70 = por %p68, %p69
      %p71 = scmp.ne.s32.totalorder %s63, %s66
      %p72 = scmp.eq.s32.totalorder %s11, 0
      %p73 = por %p71, %p72
      %p74 = scmp.ne.s32.totalorder %s63, %s66
      %p75 = scmp.eq.s32.totalorder %s16, 1
      %p76 = por %p74, %p75
      %p77 = scmp.ne.s32.totalorder %s66, %s67
      %p78 = scmp.eq.s32.totalorder %s16, 0
      %p79 = por %p77, %p78
      %p80 = scmp.ne.s32.totalorder %s66, %s67
      %p81 = scmp.eq.s32.totalorder %s17, 1
      %p82 = por %p80, %p81
      %p84 = scmp.ne.s32.totalorder %s67, %s83
      %p85 = scmp.eq.s32.totalorder %s17, 0
      %p86 = por %p84, %p85
      %s87 = ssub.s32 %s18, %s30
      %s88 = ssub.s32 %s19, %s26
      %s89 = sor.u32 %s87, %s88
      %p90 = scmp.eq.s32.totalorder %s89, 0
      %s92 = sadd.s32 %s91, 1
      %s93 = scalar_select %p90, %s91, %s92
      %p96 = pneg %p90
      %p97 = scmp.eq.s32.totalorder %s11, 1
      %p98 = por %p96, %p97
      %p99 = scmp.ne.s32.totalorder %s91, %s94
      %p100 = scmp.eq.s32.totalorder %s11, 0
      %p101 = por %p99, %p100
      %p102 = scmp.ne.s32.totalorder %s91, %s94
      %p103 = scmp.eq.s32.totalorder %s16, 1
      %p104 = por %p102, %p103
      %p105 = scmp.ne.s32.totalorder %s94, %s95
      %p106 = scmp.eq.s32.totalorder %s16, 0
      %p107 = por %p105, %p106
      %p108 = scmp.ne.s32.totalorder %s94, %s95
      %p109 = scmp.eq.s32.totalorder %s17, 1
      %p110 = por %p108, %p109
      %p112 = scmp.ne.s32.totalorder %s95, %s111
      %p113 = scmp.eq.s32.totalorder %s17, 0
      %p114 = por %p112, %p113
      %p115 = scmp.le.s32.totalorder 1, %s11
      %p116 = scmp.lt.s32.totalorder %s11, 3
      %p117 = pnand %p115, %p116
      %p118 = pneg %p117
      // Predicated region
      $region9: #{tpu_custom_call.1} parent=5 // pred_check
        _
      $region10: #{tpu_custom_call.1} parent=5 // pred_check_branch
        %120 = sbr.rel (%p117) target = $region12
      $region11: #{tpu_custom_call.1} parent=5 // pred_region
        %s121 = ssub.s32 %s11, 1
      $region12: #{tpu_custom_call.1} parent=5 // pred_fallthru
        _
      %p122 = scmp.lt.s32.totalorder %s11, 2
      // Predicated region
      $region13: #{tpu_custom_call.1} parent=5 // pred_check
        %p123 = pneg %p122
      $region14: #{tpu_custom_call.1} parent=5 // pred_check_branch
        %125 = sbr.rel (%p123) target = $region16
      $region15: #{tpu_custom_call.1} parent=5 // pred_region
        // Predicated region
        $region17: #{tpu_custom_call.1} parent=15 // pred_check
          %p126 = pneg %p45
        $region18: #{tpu_custom_call.1} parent=15 // pred_check_branch
          %128 = sbr.rel (%p126) target = $region20
        $region19: #{tpu_custom_call.1} parent=15 // pred_region
          %s129 = sand.u32 %s35, 1
          %s130 = scalar_lea.sflag [#allocation3], %s129
          %s131 = sand.u32 %s35, 1
          %s132 = smul.addr %s131, 18
          %s133 = scalar_lea.vmem [#allocation2], %s132
          %s135 = ssub.s32 288, 288
          %136 = vsyncadd %s130, %s135
          %s137 = smul.addr %s18, 9
          %s138 = sadd.s32 %s19, %s137
          %s139 = smul.addr %s138, 32
          %s140 = scalar_lea.hbm %s0, %s139
          %s141 = sshll.u32 %s133, 4
          %s142 = int_to_ptr.vmem [resolvable:$true] %s141
          %147 = dma.hbm_to_vmem [thread:$0]  %s140, 288, %s142, %s130, 32, 32, 2
        $region20: #{tpu_custom_call.1} parent=15 // pred_fallthru
          _
        // Predicated region
        $region21: #{tpu_custom_call.1} parent=15 // pred_check
          %p148 = pneg %p73
        $region22: #{tpu_custom_call.1} parent=15 // pred_check_branch
          %150 = sbr.rel (%p148) target = $region24
        $region23: #{tpu_custom_call.1} parent=15 // pred_region
          %p151 = scmp.lt.s32.totalorder %s18, 1
          %s152 = scalar_select %p151, %s18, 1
          %p153 = scmp.lt.s32.totalorder %s19, 0
          %s154 = scalar_select %p153, %s19, 0
          %s155 = sadd.s32 %s154, %s152
          %s156 = scalar_lea.vmem %s1, %s155
        $region24: #{tpu_custom_call.1} parent=15 // pred_fallthru
          _
      $region16: #{tpu_custom_call.1} parent=5 // pred_fallthru
        _
      %p157 = scmp.le.s32.totalorder 1, %s11
      %p158 = scmp.lt.s32.totalorder %s11, 3
      %p159 = pnand %p157, %p158
      %p160 = pneg %p159
      // Predicated region
      $region25: #{tpu_custom_call.1} parent=5 // pred_check
        _
      $region26: #{tpu_custom_call.1} parent=5 // pred_check_branch
        %162 = sbr.rel (%p159) target = $region28
      $region27: #{tpu_custom_call.1} parent=5 // pred_region
        %s163 = ssub.s32 %s11, 1
        %s164 = sand.u32 %s38, 1
        %s165 = scalar_lea.sflag [#allocation3], %s164
        %s166 = sand.u32 %s38, 1
        %s167 = smul.addr %s166, 18
        %s168 = scalar_lea.vmem [#allocation2], %s167
        // Predicated region
        $region29: #{tpu_custom_call.1} parent=27 // pred_check
          %p169 = pneg %p51
        $region30: #{tpu_custom_call.1} parent=27 // pred_check_branch
          %171 = sbr.rel (%p169) target = $region32
        $region31: #{tpu_custom_call.1} parent=27 // pred_region
          %172 = dma.done %s165, 288
        $region32: #{tpu_custom_call.1} parent=27 // pred_fallthru
          _
        %s173 = sand.u32 %s38, 1
        %s174 = scalar_lea.sflag [#allocation3], %s173
        %s175 = sand.u32 %s38, 1
        %s176 = smul.addr %s175, 18
        %s177 = scalar_lea.vmem [#allocation2], %s176
        %p178 = pneg %p51
        %p179 = pneg %p48
        %p180 = scmp.lt.s32.totalorder %s20, 1
        %s181 = scalar_select %p180, %s20, 1
        %p182 = scmp.lt.s32.totalorder %s21, 0
        %s183 = scalar_select %p182, %s21, 0
        %s184 = sadd.s32 %s183, %s181
        %s185 = scalar_lea.vmem %s1, %s184
        %p186 = pneg %p79
        %p187 = pneg %p76
        %p188 = pneg %p107
        %p189 = pneg %p104
        %p190 = scmp.lt.s32.totalorder %s20, 1
        %s191 = scalar_select %p190, %s20, 1
        %p192 = scmp.lt.s32.totalorder %s21, 0
        %s193 = scalar_select %p192, %s21, 0
        %s194 = smul.addr %s193, 4
        %s195 = smul.addr %s191, 4
        %s196 = sadd.s32 %s194, %s195
        %s197 = smul.addr %s196, 8
        %s198 = scalar_lea.vmem %s2, %s197
        %p199 = scmp.lt.s32.totalorder %s20, 1
        %s200 = scalar_select %p199, %s20, 1
        %p201 = scmp.lt.s32.totalorder %s21, 0
        %s202 = scalar_select %p201, %s21, 0
        %s203 = sadd.s32 %s202, %s200
        %s204 = scalar_lea.vmem %s1, %s203
        %p205 = scmp.lt.s32.totalorder %s20, 1
        %s206 = scalar_select %p205, %s20, 1
        %p207 = scmp.lt.s32.totalorder %s21, 0
        %s208 = scalar_select %p207, %s21, 0
        %s209 = smul.addr %s208, 4
        %s210 = smul.addr %s206, 4
        %s211 = sadd.s32 %s209, %s210
        %s212 = smul.addr %s211, 8
        %s213 = scalar_lea.vmem %s2, %s212
        %v214 = vld [vmem:[%s168] sm:$0x3]
        %v215 = vld [vmem:[%s168 + $0x2] sm:$0x3]
        %v216 = vld [vmem:[%s168 + $0x4] sm:$0x3]
        %v217 = vld [vmem:[%s168 + $0x6] sm:$0x3]
        %v218 = vld [vmem:[%s168 + $0x8] sm:$0x3]
        %v219 = vld [vmem:[%s168 + $0xa] sm:$0x3]
        %v220 = vld [vmem:[%s168 + $0xc] sm:$0x3]
        %v221 = vld [vmem:[%s168 + $0xe] sm:$0x3]
        %v222 = vld [vmem:[%s168 + $0x10] sm:$0x3]
        %vm223 = vcmask 1041408
        %v224 = vsel %vm223, %v214, -inf
        %v225 = vsel %vm223, %v215, -inf
        %v226 = vsel %vm223, %v216, -inf
        %v227 = vsel %vm223, %v217, -inf
        %v228 = vsel %vm223, %v218, -inf
        %v229 = vmax.f32 %v224, %v228
        %v230 = vsel %vm223, %v219, -inf
        %v231 = vmax.f32 %v225, %v230
        %v232 = vsel %vm223, %v220, -inf
        %v233 = vmax.f32 %v226, %v232
        %v234 = vsel %vm223, %v221, -inf
        %v235 = vmax.f32 %v227, %v234
        %v236 = vsel %vm223, %v222, -inf
        %v237 = vmax.f32 %v229, %v236
        %v238 = vmax.f32 %v237, %v231
        %v239 = vmax.f32 %v233, %v235
        %v240 = vmax.f32 %v238, %v239
        %v241 = vsub.f32 %v214, %v240
        %v242 = vsub.f32 %v215, %v240
        %v243 = vsub.f32 %v216, %v240
        %v244 = vsub.f32 %v217, %v240
        %v245 = vsub.f32 %v218, %v240
        %v246 = vsub.f32 %v219, %v240
        %v247 = vsub.f32 %v220, %v240
        %v248 = vsub.f32 %v221, %v240
        %v249 = vsub.f32 %v222, %v240
        %v250 = vmul.f32 %v241, 1.442695
        %v251 = vpow.pop %v250
        %v252 = vmul.f32 %v242, 1.442695
        %v253 = vpow.pop %v252
        %v254 = vmul.f32 %v243, 1.442695
        %v255 = vpow.pop %v254
        %v256 = vmul.f32 %v244, 1.442695
        %v257 = vpow.pop %v256
        %v258 = vmul.f32 %v245, 1.442695
        %v259 = vpow.pop %v258
        %v260 = vmul.f32 %v246, 1.442695
        %v261 = vpow.pop %v260
        %v262 = vmul.f32 %v247, 1.442695
        %v263 = vpow.pop %v262
        %v264 = vmul.f32 %v248, 1.442695
        %v265 = vpow.pop %v264
        %v266 = vmul.f32 %v249, 1.442695
        %v267 = vpow.pop %v266
        %v268 = vsel %vm223, %v251, 0.0
        %v269 = vsel %vm223, %v253, 0.0
        %v270 = vadd.f32 %v268, %v269
        %v271 = vsel %vm223, %v255, 0.0
        %v272 = vadd.f32 %v270, %v271
        %v273 = vsel %vm223, %v257, 0.0
        %v274 = vadd.f32 %v272, %v273
        %v275 = vsel %vm223, %v259, 0.0
        %v276 = vadd.f32 %v274, %v275
        %v277 = vsel %vm223, %v261, 0.0
        %v278 = vadd.f32 %v276, %v277
        %v279 = vsel %vm223, %v263, 0.0
        %v280 = vadd.f32 %v278, %v279
        %v281 = vsel %vm223, %v265, 0.0
        %v282 = vadd.f32 %v280, %v281
        %v283 = vsel %vm223, %v267, 0.0
        %v284 = vadd.f32 %v282, %v283
        %v285 = vrcp.pop %v284
        %v286 = vmul.f32 %v251, %v285
        %v287 = vmul.f32 %v253, %v285
        %v288 = vmul.f32 %v255, %v285
        %v289 = vmul.f32 %v257, %v285
        %v290 = vmul.f32 %v259, %v285
        %v291 = vmul.f32 %v261, %v285
        %v292 = vmul.f32 %v263, %v285
        %v293 = vmul.f32 %v265, %v285
        %v294 = vmul.f32 %v267, %v285
        %v295 = vld [vmem:[%s204] sm:$0x1]
        %v296 = vunpack.c.0.s8 %v295
        %vm297 = vcmp.eq.s32.totalorder %v296, 0
        %vm298 = vcmp.eq.s32.totalorder %v296, 1
        %vm299 = vcmp.eq.s32.totalorder %v296, 2
        %vm300 = vcmp.eq.s32.totalorder %v296, 3
        %vm301 = vcmp.eq.s32.totalorder %v296, 4
        %vm302 = vcmp.eq.s32.totalorder %v296, 5
        %vm303 = vcmp.eq.s32.totalorder %v296, 6
        %vm304 = vcmp.eq.s32.totalorder %v296, 7
        %vm305 = vcmp.eq.s32.totalorder %v296, 8
        %v306 = vsel %vm297, %v286, 0.0
        %v307 = vsel %vm298, %v287, 0.0
        %v308 = vsel %vm299, %v288, 0.0
        %v309 = vsel %vm300, %v289, 0.0
        %v310 = vsel %vm301, %v290, 0.0
        %v311 = vsel %vm302, %v291, 0.0
        %v312 = vsel %vm303, %v292, 0.0
        %v313 = vsel %vm304, %v293, 0.0
        %v314 = vsel %vm305, %v294, 0.0
        %v315 = vsel %vm223, %v306, 0.0
        %v316 = vrot.slane %v315, 4
        %v317 = vadd.f32 %v315, %v316
        %v318 = vrot.slane %v317, 2
        %v319 = vadd.f32 %v317, %v318
        %v320 = vrot.slane %v319, 1
        %v321 = vadd.f32 %v319, %v320
        %v322 = vsel %vm223, %v307, 0.0
        %v323 = vrot.slane %v322, 4
        %v324 = vadd.f32 %v322, %v323
        %v325 = vrot.slane %v324, 2
        %v326 = vadd.f32 %v324, %v325
        %v327 = vrot.slane %v326, 1
        %v328 = vadd.f32 %v326, %v327
        %v329 = vsel %vm223, %v308, 0.0
        %v330 = vrot.slane %v329, 4
        %v331 = vadd.f32 %v329, %v330
        %v332 = vrot.slane %v331, 2
        %v333 = vadd.f32 %v331, %v332
        %v334 = vrot.slane %v333, 1
        %v335 = vadd.f32 %v333, %v334
        %v336 = vsel %vm223, %v309, 0.0
        %v337 = vrot.slane %v336, 4
        %v338 = vadd.f32 %v336, %v337
        %v339 = vrot.slane %v338, 2
        %v340 = vadd.f32 %v338, %v339
        %v341 = vrot.slane %v340, 1
        %v342 = vadd.f32 %v340, %v341
        %v343 = vsel %vm223, %v310, 0.0
        %v344 = vrot.slane %v343, 4
        %v345 = vadd.f32 %v343, %v344
        %v346 = vrot.slane %v345, 2
        %v347 = vadd.f32 %v345, %v346
        %v348 = vrot.slane %v347, 1
        %v349 = vadd.f32 %v347, %v348
        %v350 = vsel %vm223, %v311, 0.0
        %v351 = vrot.slane %v350, 4
        %v352 = vadd.f32 %v350, %v351
        %v353 = vrot.slane %v352, 2
        %v354 = vadd.f32 %v352, %v353
        %v355 = vrot.slane %v354, 1
        %v356 = vadd.f32 %v354, %v355
        %v357 = vsel %vm223, %v312, 0.0
        %v358 = vrot.slane %v357, 4
        %v359 = vadd.f32 %v357, %v358
        %v360 = vrot.slane %v359, 2
        %v361 = vadd.f32 %v359, %v360
        %v362 = vrot.slane %v361, 1
        %v363 = vadd.f32 %v361, %v362
        %v364 = vsel %vm223, %v313, 0.0
        %v365 = vrot.slane %v364, 4
        %v366 = vadd.f32 %v364, %v365
        %v367 = vrot.slane %v366, 2
        %v368 = vadd.f32 %v366, %v367
        %v369 = vrot.slane %v368, 1
        %v370 = vadd.f32 %v368, %v369
        %v371 = vsel %vm223, %v314, 0.0
        %v372 = vrot.slane %v371, 4
        %v373 = vadd.f32 %v371, %v372
        %v374 = vrot.slane %v373, 2
        %v375 = vadd.f32 %v373, %v374
        %v376 = vrot.slane %v375, 1
        %v377 = vadd.f32 %v375, %v376
        %vm387 = vcmask 1041409
        %v388 = vsel %vm387, %v328, %v321
        %vm389 = vcmask 1042434
        %v390 = vsel %vm389, %v335, %v388
        %vm391 = vcmask 1043459
        %v392 = vsel %vm391, %v342, %v390
        %vm393 = vcmask 1044484
        %v394 = vsel %vm393, %v349, %v392
        %vm395 = vcmask 1045509
        %v396 = vsel %vm395, %v356, %v394
        %vm397 = vcmask 1046534
        %v398 = vsel %vm397, %v363, %v396
        %vm399 = vcmask 1047559
        %v400 = vsel %vm399, %v370, %v398
        %403 = vst [vmem:[%s213] sm:$0xff] %v400
        %404 = vst [vmem:[%s213 + $0x8] sm:$0x1] %v377
        %v405 = vmul.f32 %v286, %v286
        %v406 = vmul.f32 %v287, %v287
        %v407 = vmul.f32 %v288, %v288
        %v408 = vmul.f32 %v289, %v289
        %v409 = vmul.f32 %v290, %v290
        %v410 = vmul.f32 %v291, %v291
        %v411 = vmul.f32 %v292, %v292
        %v412 = vmul.f32 %v293, %v293
        %v413 = vmul.f32 %v294, %v294
        %v414 = vsel %vm223, %v405, 0.0
        %v415 = vrot.slane %v414, 4
        %v416 = vadd.f32 %v414, %v415
        %v417 = vrot.slane %v416, 2
        %v418 = vadd.f32 %v416, %v417
        %v419 = vrot.slane %v418, 1
        %v420 = vadd.f32 %v418, %v419
        %v421 = vsel %vm223, %v406, 0.0
        %v422 = vrot.slane %v421, 4
        %v423 = vadd.f32 %v421, %v422
        %v424 = vrot.slane %v423, 2
        %v425 = vadd.f32 %v423, %v424
        %v426 = vrot.slane %v425, 1
        %v427 = vadd.f32 %v425, %v426
        %v428 = vsel %vm223, %v407, 0.0
        %v429 = vrot.slane %v428, 4
        %v430 = vadd.f32 %v428, %v429
        %v431 = vrot.slane %v430, 2
        %v432 = vadd.f32 %v430, %v431
        %v433 = vrot.slane %v432, 1
        %v434 = vadd.f32 %v432, %v433
        %v435 = vsel %vm223, %v408, 0.0
        %v436 = vrot.slane %v435, 4
        %v437 = vadd.f32 %v435, %v436
        %v438 = vrot.slane %v437, 2
        %v439 = vadd.f32 %v437, %v438
        %v440 = vrot.slane %v439, 1
        %v441 = vadd.f32 %v439, %v440
        %v442 = vsel %vm223, %v409, 0.0
        %v443 = vrot.slane %v442, 4
        %v444 = vadd.f32 %v442, %v443
        %v445 = vrot.slane %v444, 2
        %v446 = vadd.f32 %v444, %v445
        %v447 = vrot.slane %v446, 1
        %v448 = vadd.f32 %v446, %v447
        %v449 = vsel %vm223, %v410, 0.0
        %v450 = vrot.slane %v449, 4
        %v451 = vadd.f32 %v449, %v450
        %v452 = vrot.slane %v451, 2
        %v453 = vadd.f32 %v451, %v452
        %v454 = vrot.slane %v453, 1
        %v455 = vadd.f32 %v453, %v454
        %v456 = vsel %vm223, %v411, 0.0
        %v457 = vrot.slane %v456, 4
        %v458 = vadd.f32 %v456, %v457
        %v459 = vrot.slane %v458, 2
        %v460 = vadd.f32 %v458, %v459
        %v461 = vrot.slane %v460, 1
        %v462 = vadd.f32 %v460, %v461
        %v463 = vsel %vm223, %v412, 0.0
        %v464 = vrot.slane %v463, 4
        %v465 = vadd.f32 %v463, %v464
        %v466 = vrot.slane %v465, 2
        %v467 = vadd.f32 %v465, %v466
        %v468 = vrot.slane %v467, 1
        %v469 = vadd.f32 %v467, %v468
        %v470 = vsel %vm223, %v413, 0.0
        %v471 = vrot.slane %v470, 4
        %v472 = vadd.f32 %v470, %v471
        %v473 = vrot.slane %v472, 2
        %v474 = vadd.f32 %v472, %v473
        %v475 = vrot.slane %v474, 1
        %v476 = vadd.f32 %v474, %v475
        %v486 = vsel %vm387, %v427, %v420
        %v487 = vsel %vm389, %v434, %v486
        %v488 = vsel %vm391, %v441, %v487
        %v489 = vsel %vm393, %v448, %v488
        %v490 = vsel %vm395, %v455, %v489
        %v491 = vsel %vm397, %v462, %v490
        %v492 = vsel %vm399, %v469, %v491
        %s495 = scalar_lea.vmem %s213, 16
        %496 = vst [vmem:[%s495] sm:$0xff] %v492
        %497 = vst [vmem:[%s495 + $0x8] sm:$0x1] %v476
        %p498 = scmp.lt.s32.totalorder %s20, 1
        %s499 = scalar_select %p498, %s20, 1
        %p500 = scmp.lt.s32.totalorder %s21, 0
        %s501 = scalar_select %p500, %s21, 0
        %s502 = smul.addr %s501, 4
        %s503 = smul.addr %s499, 4
        %s504 = sadd.s32 %s502, %s503
        %s505 = smul.addr %s504, 8
        %s506 = scalar_lea.vmem %s2, %s505
        // Predicated region
        $region33: #{tpu_custom_call.1} parent=27 // pred_check
          %p507 = pneg %p104
        $region34: #{tpu_custom_call.1} parent=27 // pred_check_branch
          %509 = sbr.rel (%p507) target = $region36
        $region35: #{tpu_custom_call.1} parent=27 // pred_region
          _
        $region36: #{tpu_custom_call.1} parent=27 // pred_fallthru
          _
      $region28: #{tpu_custom_call.1} parent=5 // pred_fallthru
        _
      %p510 = scmp.le.s32.totalorder 2, %s11
      // Predicated region
      $region37: #{tpu_custom_call.1} parent=5 // pred_check
        %p511 = pneg %p510
      $region38: #{tpu_custom_call.1} parent=5 // pred_check_branch
        %513 = sbr.rel (%p511) target = $region40
      $region39: #{tpu_custom_call.1} parent=5 // pred_region
        %s514 = ssub.s32 %s11, 2
        // Predicated region
        $region41: #{tpu_custom_call.1} parent=39 // pred_check
          %p515 = pneg %p110
        $region42: #{tpu_custom_call.1} parent=39 // pred_check_branch
          %517 = sbr.rel (%p515) target = $region44
        $region43: #{tpu_custom_call.1} parent=39 // pred_region
          %p518 = scmp.lt.s32.totalorder %s22, 1
          %s519 = scalar_select %p518, %s22, 1
          %p520 = scmp.lt.s32.totalorder %s23, 0
          %s521 = scalar_select %p520, %s23, 0
          %s522 = smul.addr %s521, 4
          %s523 = smul.addr %s519, 4
          %s524 = sadd.s32 %s522, %s523
          %s525 = smul.addr %s524, 8
          %s526 = scalar_lea.vmem %s2, %s525
        $region44: #{tpu_custom_call.1} parent=39 // pred_fallthru
          _
      $region40: #{tpu_custom_call.1} parent=5 // pred_fallthru
        _
    $region6: #{tpu_custom_call.1} parent=1 // loop_footer
      %s15 = sadd.s32 1, %s11
    $region7: #{tpu_custom_call.1} parent=1 // loop_footer_branch
      %10 = sbr.rel target = $region3
    $region8: #{tpu_custom_call.1} parent=1 // loop_exit
      _
    %527 = vsyncpa [#allocation3], 1
    %s528 = scalar_lea.sflag [#allocation3], 1
    %529 = vsyncpa %s528, 1

</llo_original>
